<compile_context>
chip_gen: v6e
topology: v6e:2x2x1
jax: 0.10.0
libtpu: 0.0.40
codegen_flags: <defaults>
</compile_context>

<pallas_src>
import jax
import jax.numpy as jnp
from jax import lax
from jax.experimental import pallas as pl
from jax.experimental.pallas import tpu as pltpu


def _cdiv(a, b):
    return (a + b - 1) // b


def _round_up(x, m):
    return _cdiv(x, m) * m


def _pick_tile(dim, max_tile, align):
    """Largest tile <= max_tile (multiple of `align`) that minimizes padding.

    Instead of min(max_tile, round_up(dim, align)) — which can waste up to a
    whole tile of MXU work — derive the tile from the number of tiles needed,
    so the padded extent overshoots `dim` by < `align` per tile.
    """
    dim_al = _round_up(dim, align)
    if dim_al <= max_tile:
        return dim_al
    n_tiles = _cdiv(dim_al, max_tile)
    return _round_up(_cdiv(dim_al, n_tiles), align)


def _make_kernel(n_weights, compute_dtype):
    def kernel(*refs):
        # refs = (x, w0[, w1], bias, out, acc_scratch)
        x_ref = refs[0]
        w_refs = refs[1:1 + n_weights]
        b_ref = refs[1 + n_weights]
        o_ref = refs[2 + n_weights]
        acc_ref = refs[3 + n_weights]

        k = pl.program_id(2)

        @pl.when(k == 0)
        def _():
            # Seed the accumulator with the broadcast bias: saves a separate
            # finalize-time VPU add + extra accumulator read.
            acc_ref[...] = jnp.broadcast_to(
                b_ref[...].astype(jnp.float32), acc_ref.shape
            )

        # In-kernel weight fusion: the VPU add + cast are free filler under an
        # MXU-bound loop and avoid a full wrapper-side HBM pass over W.
        w = w_refs[0][...]
        if n_weights == 2:
            w = w + w_refs[1][...]
        w = w.astype(compute_dtype)

        # NT-layout matmul: x tile (tm, tk) contracts with the torch-layout
        # weight tile (tn, tk) on the last dim of both — no transpose of the
        # weight is ever materialized; the MXU handles the transposed RHS.
        acc_ref[...] += lax.dot_general(
            x_ref[...].astype(compute_dtype),
            w,
            dimension_numbers=(((1,), (1,)), ((), ())),
            preferred_element_type=jnp.float32,
        )

        @pl.when(k == pl.num_programs(2) - 1)
        def _():
            o_ref[...] = acc_ref[...].astype(o_ref.dtype)

    return kernel


def stealth_linear(x, w0, w1, b, *, tm=512, tn=512, tk=512,
                   mxu_dtype=jnp.bfloat16):
    """y = x @ (w0 + w1).T + b   (matches torch F.linear(x, w0 + w1, b)).

    w0, w1: (nout, nin) torch-layout weights; fused in-kernel on the VPU.
            If weights are static across calls, pre-fuse once and pass the
            fused (nout, nin) array as `w0` with `w1=None` (and optionally
            pre-cast it to `mxu_dtype`) to halve weight HBM traffic.
    mxu_dtype: MXU input dtype (default bf16; accumulation is always f32 and
            the bias is added in f32).  Pass None for a strict f32 path.
    """
    orig_shape = x.shape
    nin = orig_shape[-1]
    nout = w0.shape[0]
    out_dtype = x.dtype

    compute_dtype = jnp.dtype(mxu_dtype) if mxu_dtype is not None else jnp.dtype(x.dtype)

    x2d = x.reshape(-1, nin)
    M = x2d.shape[0]
    if x2d.dtype != compute_dtype:
        # One cheap elementwise pass over the activation; halves x HBM
        # re-reads inside the kernel (x is re-fetched Np/tn times) and packs
        # 16 rows per vreg for bf16.
        x2d = x2d.astype(compute_dtype)

    weights = [w0] if w1 is None else [w0, w1]
    b2d = b.reshape(1, nout).astype(jnp.float32)

    # Sublane alignment of the M (row) axis follows the packed compute dtype:
    # f32 -> 8, bf16 -> 16, fp8/int8 -> 32.
    m_align = max(8, 32 // compute_dtype.itemsize)

    tm_eff = _pick_tile(M, _round_up(tm, m_align), m_align)
    tk_eff = _pick_tile(nin, _round_up(tk, 128), 128)
    tn_eff = _pick_tile(nout, _round_up(tn, 128), 128)

    Mp = _round_up(M, tm_eff)
    Kp = _round_up(nin, tk_eff)
    Np = _round_up(nout, tn_eff)

    # Zero-pad only what is actually misaligned (zero K-padding contributes
    # nothing to the matmul; padded M/N are sliced off below).
    if (Mp, Kp) != (M, nin):
        x2d = jnp.pad(x2d, ((0, Mp - M), (0, Kp - nin)))
    if (Np, Kp) != (nout, nin):
        weights = [jnp.pad(w, ((0, Np - nout), (0, Kp - nin))) for w in weights]
    if Np != nout:
        b2d = jnp.pad(b2d, ((0, 0), (0, Np - nout)))

    grid = (Mp // tm_eff, Np // tn_eff, Kp // tk_eff)
    gm, gn, _ = grid

    kernel = _make_kernel(len(weights), compute_dtype)

    x_item = compute_dtype.itemsize
    w_item = jnp.dtype(weights[0].dtype).itemsize
    out_item = jnp.dtype(out_dtype).itemsize

    # Cost estimate counting HBM tile revisits (x re-read gn times, weights gm
    # times) on the padded problem.
    cost = pl.CostEstimate(
        flops=2 * Mp * Kp * Np,
        transcendentals=0,
        bytes_accessed=int(
            Mp * Kp * x_item * gn
            + len(weights) * Np * Kp * w_item * gm
            + Np * 4 * gm
            + Mp * Np * out_item
        ),
    )

    # Double-buffered input tiles + f32 accumulator + double-buffered output;
    # give the compiler an explicit budget with headroom, capped below v7x's
    # 64 MiB physical VMEM per TensorCore.
    vmem_bytes = (
        2 * tm_eff * tk_eff * x_item
        + 2 * len(weights) * tn_eff * tk_eff * w_item
        + 2 * tn_eff * 4
        + tm_eff * tn_eff * 4
        + 2 * tm_eff * tn_eff * out_item
    )
    vmem_limit = int(min(max(2 * vmem_bytes, 32 << 20), 64 << 20))

    in_specs = [pl.BlockSpec((tm_eff, tk_eff), lambda i, j, k: (i, k))]   # x
    in_specs += [
        pl.BlockSpec((tn_eff, tk_eff), lambda i, j, k: (j, k))           # w0[, w1]
        for _ in weights
    ]
    in_specs += [pl.BlockSpec((1, tn_eff), lambda i, j, k: (0, j))]       # bias

    out = pl.pallas_call(
        kernel,
        out_shape=jax.ShapeDtypeStruct((Mp, Np), out_dtype),
        grid_spec=pltpu.PrefetchScalarGridSpec(
            num_scalar_prefetch=0,
            grid=grid,
            in_specs=in_specs,
            out_specs=pl.BlockSpec((tm_eff, tn_eff), lambda i, j, k: (i, j)),
            scratch_shapes=[pltpu.VMEM((tm_eff, tn_eff), jnp.float32)],
        ),
        compiler_params=pltpu.CompilerParams(
            # M/N are independent (shard across v7x's two TensorCores); K is
            # the resident-accumulator reduction, hence "arbitrary" and last.
            dimension_semantics=("parallel", "parallel", "arbitrary"),
            vmem_limit_bytes=vmem_limit,
        ),
        cost_estimate=cost,
    )(x2d, *weights, b2d)

    out = out[:M, :nout]
    return out.reshape(*orig_shape[:-1], nout)


if __name__ == "__main__":
    # Small, module-consistent shapes: x (batch=2, seq=8, nin=32) -> (2, 8, nout=16)
    nin, nout = 32, 16
    key = jax.random.PRNGKey(0)
    kx, kw0, kw1, kb = jax.random.split(key, 4)

    # Deterministic "nn.Linear"-style init: U(-1/sqrt(nin), 1/sqrt(nin))
    bound = 1.0 / (nin ** 0.5)
    x = jax.random.normal(kx, (2, 8, nin), dtype=jnp.float32)
    w0 = jax.random.uniform(kw0, (nout, nin), jnp.float32, -bound, bound)
    w1 = jax.random.uniform(kw1, (nout, nin), jnp.float32, -bound, bound)
    b = jax.random.uniform(kb, (nout,), jnp.float32, -bound, bound)

    y_ref = x @ (w0 + w1).T + b

    # Default path: bf16 MXU inputs, f32 accumulation, in-kernel weight fusion.
    y = jax.block_until_ready(stealth_linear(x, w0, w1, b))
    assert y.shape == (2, 8, nout)
    assert jnp.allclose(y, y_ref, atol=3e-2, rtol=3e-2), "bf16 path mismatch"

    # Strict f32 path (opt-in): tight numerical check against the reference.
    y32 = jax.block_until_ready(stealth_linear(x, w0, w1, b, mxu_dtype=None))
    assert jnp.allclose(y32, y_ref, atol=1e-5, rtol=1e-5), "f32 path mismatch"

    # Ragged-M case (batch*seq not a multiple of the sublane packing).
    x2 = jax.random.normal(kx, (2, 7, nin), dtype=jnp.float32)
    y2 = jax.block_until_ready(stealth_linear(x2, w0, w1, b, mxu_dtype=None))
    y2_ref = x2 @ (w0 + w1).T + b
    assert y2.shape == (2, 7, nout)
    assert jnp.allclose(y2, y2_ref, atol=1e-5, rtol=1e-5), "ragged-M mismatch"

    # Static-weight fast path: caller pre-fuses (and pre-casts) the weight once.
    w_fused = (w0 + w1).astype(jnp.bfloat16)
    y3 = jax.block_until_ready(stealth_linear(x, w_fused, None, b))
    assert jnp.allclose(y3, y_ref, atol=3e-2, rtol=3e-2), "fused-weight mismatch"

    print("KERNEL_OK")
</pallas_src>

<mosaic_0001>
module attributes {stable_mosaic.version = 11 : i64} {
  func.func @kernel(%arg0: i32, %arg1: i32, %arg2: i32, %arg3: memref<16x128xbf16, #tpu.memory_space<vmem>>, %arg4: memref<128x128xf32, #tpu.memory_space<vmem>>, %arg5: memref<128x128xf32, #tpu.memory_space<vmem>>, %arg6: memref<1x128xf32, #tpu.memory_space<vmem>>, %arg7: memref<16x128xf32, #tpu.memory_space<vmem>>, %arg8: memref<16x128xf32, #tpu.memory_space<vmem>>) attributes {dimension_semantics = [#tpu.dimension_semantics<parallel>, #tpu.dimension_semantics<parallel>, #tpu.dimension_semantics<arbitrary>], iteration_bounds = array<i64: 1, 1, 1>, scalar_prefetch = 0 : i64, scratch_operands = 1 : i64, tpu.core_type = #tpu.core_type<tc>, window_params = [{transform_indices = @transform_0, window_bounds = array<i64: 16, 128>}, {transform_indices = @transform_1, window_bounds = array<i64: 128, 128>}, {transform_indices = @transform_2, window_bounds = array<i64: 128, 128>}, {transform_indices = @transform_3, window_bounds = array<i64: 1, 128>}, {transform_indices = @transform_4, window_bounds = array<i64: 16, 128>}]} {
    %c0_i32 = arith.constant 0 : i32
    %0 = arith.cmpi eq, %arg2, %c0_i32 : i32
    %1 = arith.extui %0 : i1 to i32
    %c0_i32_0 = arith.constant 0 : i32
    %2 = arith.cmpi ne, %1, %c0_i32_0 : i32
    scf.if %2 {
      %c0_12 = arith.constant 0 : index
      %c0_13 = arith.constant 0 : index
      %15 = vector.load %arg6[%c0_12, %c0_13] : memref<1x128xf32, #tpu.memory_space<vmem>>, vector<1x128xf32>
      %16 = vector.shape_cast %15 : vector<1x128xf32> to vector<1x128xf32>
      %17 = vector.broadcast %16 : vector<1x128xf32> to vector<16x128xf32>
      %c0_14 = arith.constant 0 : index
      %c0_15 = arith.constant 0 : index
      %18 = vector.load %arg8[%c0_14, %c0_15] : memref<16x128xf32, #tpu.memory_space<vmem>>, vector<16x128xf32>
      tpu.vector_store %arg8[%c0_14, %c0_15], %17 {strides = array<i32>} : memref<16x128xf32, #tpu.memory_space<vmem>>, vector<16x128xf32>,
    } else {
    }
    %c0 = arith.constant 0 : index
    %c0_1 = arith.constant 0 : index
    %3 = vector.load %arg4[%c0, %c0_1] : memref<128x128xf32, #tpu.memory_space<vmem>>, vector<128x128xf32>
    %c0_2 = arith.constant 0 : index
    %c0_3 = arith.constant 0 : index
    %4 = vector.load %arg5[%c0_2, %c0_3] : memref<128x128xf32, #tpu.memory_space<vmem>>, vector<128x128xf32>
    %5 = arith.addf %3, %4 : vector<128x128xf32>
    %6 = arith.truncf %5 : vector<128x128xf32> to vector<128x128xbf16>
    %c0_4 = arith.constant 0 : index
    %c0_5 = arith.constant 0 : index
    %7 = vector.load %arg8[%c0_4, %c0_5] : memref<16x128xf32, #tpu.memory_space<vmem>>, vector<16x128xf32>
    %c0_6 = arith.constant 0 : index
    %c0_7 = arith.constant 0 : index
    %8 = vector.load %arg3[%c0_6, %c0_7] : memref<16x128xbf16, #tpu.memory_space<vmem>>, vector<16x128xbf16>
    %cst = arith.constant dense<0.000000e+00> : vector<16x128xf32>
    %9 = tpu.matmul %8, %6, %cst {dimension_numbers = #tpu.dot_dimension_numbers<[1], [1], [0], [0], [0, 0, 1, 0], [], []>} : vector<16x128xbf16>, vector<128x128xbf16>, vector<16x128xf32> -> vector<16x128xf32>
    %10 = arith.addf %7, %9 : vector<16x128xf32>
    %c0_8 = arith.constant 0 : index
    %c0_9 = arith.constant 0 : index
    %11 = vector.load %arg8[%c0_8, %c0_9] : memref<16x128xf32, #tpu.memory_space<vmem>>, vector<16x128xf32>
    tpu.vector_store %arg8[%c0_8, %c0_9], %10 {strides = array<i32>} : memref<16x128xf32, #tpu.memory_space<vmem>>, vector<16x128xf32>,
    %c0_i32_10 = arith.constant 0 : i32
    %12 = arith.cmpi eq, %arg2, %c0_i32_10 : i32
    %13 = arith.extui %12 : i1 to i32
    %c0_i32_11 = arith.constant 0 : i32
    %14 = arith.cmpi ne, %13, %c0_i32_11 : i32
    scf.if %14 {
      %c0_12 = arith.constant 0 : index
      %c0_13 = arith.constant 0 : index
      %15 = vector.load %arg8[%c0_12, %c0_13] : memref<16x128xf32, #tpu.memory_space<vmem>>, vector<16x128xf32>
      %c0_14 = arith.constant 0 : index
      %c0_15 = arith.constant 0 : index
      %16 = vector.load %arg7[%c0_14, %c0_15] : memref<16x128xf32, #tpu.memory_space<vmem>>, vector<16x128xf32>
      tpu.vector_store %arg7[%c0_14, %c0_15], %15 {strides = array<i32>} : memref<16x128xf32, #tpu.memory_space<vmem>>, vector<16x128xf32>,
    } else {
    }
    return
  }
  func.func @transform_0(%arg0: i32, %arg1: i32, %arg2: i32) -> (i32, i32) {
    %c0_i32 = arith.constant 0 : i32
    return %arg0, %arg2 : i32, i32
  }
  func.func @transform_1(%arg0: i32, %arg1: i32, %arg2: i32) -> (i32, i32) {
    %c0_i32 = arith.constant 0 : i32
    return %arg1, %arg2 : i32, i32
  }
  func.func @transform_2(%arg0: i32, %arg1: i32, %arg2: i32) -> (i32, i32) {
    %c0_i32 = arith.constant 0 : i32
    return %arg1, %arg2 : i32, i32
  }
  func.func @transform_3(%arg0: i32, %arg1: i32, %arg2: i32) -> (i32, i32) {
    %c0_i32 = arith.constant 0 : i32
    %c0_i32_0 = arith.constant 0 : i32
    return %c0_i32, %arg1 : i32, i32
  }
  func.func @transform_4(%arg0: i32, %arg1: i32, %arg2: i32) -> (i32, i32) {
    %c0_i32 = arith.constant 0 : i32
    return %arg0, %arg1 : i32, i32
  }
}

</mosaic_0001>

<llo_original>
// kernel: tpu_custom_call.1
$region0: #{tpu_custom_call.1}
  #allocation0 [shape = 'u32[]', space=smem, size = 0x4, offset = 0x4, fixed_abs, tag = 'smem constant byte address 0x4 - core index']
  #allocation1 [shape = 'u32[144,128]{1,0:T(1,128)}', space=vmem, size = 0x12000, scoped, tag = 'internal scratch']
  #allocation2 [shape = 'f32[16,128]{1,0:T(8,128)}', space=vmem, size = 0x2000, scoped, tag = 'scratch operand']
  %s0 = inlined_call_operand.hbm [shape: bf16[16,128], index: 0, kind: input, shape index: {}]
  %s1 = inlined_call_operand.hbm [shape: f32[128,128], index: 1, kind: input, shape index: {}]
  %s2 = inlined_call_operand.hbm [shape: f32[128,128], index: 2, kind: input, shape index: {}]
  %s3 = inlined_call_operand.vmem [shape: f32[1,128], index: 3, kind: input, shape index: {}]
  %s4 = inlined_call_operand.hbm [shape: f32[16,128], index: 4, kind: output, shape index: {}]
  %s5 = sld [smem:[#allocation0]]
  $region46: #{tpu_custom_call.1} parent=0
    _
  %s7 = ssub.s32 1, %s5
  %s8 = scalar_select 0, %s7, %s5
  $region1: #{tpu_custom_call.1} parent=0
    #allocation3 [shape = 'u8[4096]{0}', space=vmem, size = 0x1000, scoped, tag = 'input window, operand 0, single buffered']
    #allocation4 [shape = 's32[1]{0}', space=sflag, size = 0x4, scoped, tag = 'scoped memory for tpu_custom_call.1']
    #allocation5 [shape = 's32[1]{0}', space=sflag, size = 0x4, scoped, tag = 'scoped memory for tpu_custom_call.1']
    #allocation6 [shape = 'u8[65536]{0}', space=vmem, size = 0x10000, scoped, tag = 'input window, operand 1, single buffered']
    #allocation7 [shape = 's32[1]{0}', space=sflag, size = 0x4, scoped, tag = 'scoped memory for tpu_custom_call.1']
    #allocation8 [shape = 'u8[65536]{0}', space=vmem, size = 0x10000, scoped, tag = 'input window, operand 2, single buffered']
    #allocation9 [shape = 'u8[8192]{0}', space=vmem, size = 0x2000, scoped, tag = 'output window, operand 0, single buffered']
    %9 = vsyncpa [#allocation4], 0
    %10 = vsyncpa [#allocation7], 0
    %11 = vsyncpa [#allocation5], 0
    // Predicated region
    $region2: #{tpu_custom_call.1} parent=1 // pred_check
      _
    $region3: #{tpu_custom_call.1} parent=1 // pred_check_branch
      %13 = sbr.rel (0) target = $region5
    $region4: #{tpu_custom_call.1} parent=1 // pred_region
      %s15 = ssub.s32 128, 128
      %16 = vsyncadd [#allocation4], %s15
      %s17 = sshll.u32 [#allocation3], 4
      %s18 = int_to_ptr.vmem [resolvable:$true] %s17
      %23 = dma.hbm_to_vmem [thread:$0]  %s0, 128, %s18, [#allocation4], 64, 64, 4
    $region5: #{tpu_custom_call.1} parent=1 // pred_fallthru
      _
    // Predicated region
    $region6: #{tpu_custom_call.1} parent=1 // pred_check
      _
    $region7: #{tpu_custom_call.1} parent=1 // pred_check_branch
      %25 = sbr.rel (0) target = $region9
    $region8: #{tpu_custom_call.1} parent=1 // pred_region
      %s27 = ssub.s32 2048, 2048
      %28 = vsyncadd [#allocation7], %s27
      %s29 = sshll.u32 [#allocation6], 4
      %s30 = int_to_ptr.vmem [resolvable:$true] %s29
      %35 = dma.hbm_to_vmem [thread:$0]  %s1, 2048, %s30, [#allocation7], 128, 128, 8
    $region9: #{tpu_custom_call.1} parent=1 // pred_fallthru
      _
    // Predicated region
    $region10: #{tpu_custom_call.1} parent=1 // pred_check
      _
    $region11: #{tpu_custom_call.1} parent=1 // pred_check_branch
      %37 = sbr.rel (0) target = $region13
    $region12: #{tpu_custom_call.1} parent=1 // pred_region
      %s39 = ssub.s32 2048, 2048
      %40 = vsyncadd [#allocation7], %s39
      %s41 = sshll.u32 [#allocation8], 4
      %s42 = int_to_ptr.vmem [resolvable:$true] %s41
      %47 = dma.hbm_to_vmem [thread:$0]  %s2, 2048, %s42, [#allocation7], 128, 128, 8
    $region13: #{tpu_custom_call.1} parent=1 // pred_fallthru
      _
    // Predicated region
    $region14: #{tpu_custom_call.1} parent=1 // pred_check
      _
    $region15: #{tpu_custom_call.1} parent=1 // pred_check_branch
      %49 = sbr.rel (0) target = $region17
    $region16: #{tpu_custom_call.1} parent=1 // pred_region
      _
    $region17: #{tpu_custom_call.1} parent=1 // pred_fallthru
      _
    // Predicated region
    $region18: #{tpu_custom_call.1} parent=1 // pred_check
      _
    $region19: #{tpu_custom_call.1} parent=1 // pred_check_branch
      %51 = sbr.rel (0) target = $region21
    $region20: #{tpu_custom_call.1} parent=1 // pred_region
      %52 = dma.done [#allocation4], 128
    $region21: #{tpu_custom_call.1} parent=1 // pred_fallthru
      _
    // Predicated region
    $region22: #{tpu_custom_call.1} parent=1 // pred_check
      _
    $region23: #{tpu_custom_call.1} parent=1 // pred_check_branch
      %54 = sbr.rel (0) target = $region25
    $region24: #{tpu_custom_call.1} parent=1 // pred_region
      %55 = dma.done [#allocation7], 2048
    $region25: #{tpu_custom_call.1} parent=1 // pred_fallthru
      _
    // Predicated region
    $region26: #{tpu_custom_call.1} parent=1 // pred_check
      _
    $region27: #{tpu_custom_call.1} parent=1 // pred_check_branch
      %57 = sbr.rel (0) target = $region29
    $region28: #{tpu_custom_call.1} parent=1 // pred_region
      %58 = dma.done [#allocation7], 2048
    $region29: #{tpu_custom_call.1} parent=1 // pred_fallthru
      _
    %p60 = scmp.eq.s32.totalorder 0, 0
    // Predicated region
    $region30: #{tpu_custom_call.1} parent=1 // pred_check
      %p61 = pneg %p60
    $region31: #{tpu_custom_call.1} parent=1 // pred_check_branch
      %63 = sbr.rel (%p61) target = $region33
    $region32: #{tpu_custom_call.1} parent=1 // pred_region
      %v64 = vld [vmem:[%s3] sm:$0x1]
      %v66 = vlaneseq
      %v67 = vshrl.u32 %v66, 7
      %v68 = vsub.s32 0, %v67
      %v69 = vrot.slane %v64, %v68
      %71 = vst [vmem:[#allocation2] sm:$0xff] %v69
      %72 = vst [vmem:[#allocation2 + $0x8] sm:$0xff] %v69
    $region33: #{tpu_custom_call.1} parent=1 // pred_fallthru
      _
    %v73 = vld [vmem:[#allocation6] sm:$0xff]
    %v74 = vld [vmem:[#allocation6 + $0x8] sm:$0xff]
    %v75 = vld [vmem:[#allocation6 + $0x10] sm:$0xff]
    %v76 = vld [vmem:[#allocation6 + $0x18] sm:$0xff]
    %v77 = vld [vmem:[#allocation6 + $0x20] sm:$0xff]
    %v78 = vld [vmem:[#allocation6 + $0x28] sm:$0xff]
    %v79 = vld [vmem:[#allocation6 + $0x30] sm:$0xff]
    %v80 = vld [vmem:[#allocation6 + $0x38] sm:$0xff]
    %v81 = vld [vmem:[#allocation6 + $0x40] sm:$0xff]
    %v82 = vld [vmem:[#allocation6 + $0x48] sm:$0xff]
    %v83 = vld [vmem:[#allocation6 + $0x50] sm:$0xff]
    %v84 = vld [vmem:[#allocation6 + $0x58] sm:$0xff]
    %v85 = vld [vmem:[#allocation6 + $0x60] sm:$0xff]
    %v86 = vld [vmem:[#allocation6 + $0x68] sm:$0xff]
    %v87 = vld [vmem:[#allocation6 + $0x70] sm:$0xff]
    %v88 = vld [vmem:[#allocation6 + $0x78] sm:$0xff]
    %v89 = vld [vmem:[#allocation8] sm:$0xff]
    %v90 = vld [vmem:[#allocation8 + $0x8] sm:$0xff]
    %v91 = vld [vmem:[#allocation8 + $0x10] sm:$0xff]
    %v92 = vld [vmem:[#allocation8 + $0x18] sm:$0xff]
    %v93 = vld [vmem:[#allocation8 + $0x20] sm:$0xff]
    %v94 = vld [vmem:[#allocation8 + $0x28] sm:$0xff]
    %v95 = vld [vmem:[#allocation8 + $0x30] sm:$0xff]
    %v96 = vld [vmem:[#allocation8 + $0x38] sm:$0xff]
    %v97 = vld [vmem:[#allocation8 + $0x40] sm:$0xff]
    %v98 = vld [vmem:[#allocation8 + $0x48] sm:$0xff]
    %v99 = vld [vmem:[#allocation8 + $0x50] sm:$0xff]
    %v100 = vld [vmem:[#allocation8 + $0x58] sm:$0xff]
    %v101 = vld [vmem:[#allocation8 + $0x60] sm:$0xff]
    %v102 = vld [vmem:[#allocation8 + $0x68] sm:$0xff]
    %v103 = vld [vmem:[#allocation8 + $0x70] sm:$0xff]
    %v104 = vld [vmem:[#allocation8 + $0x78] sm:$0xff]
    %v105 = vadd.f32 %v73, %v89
    %v106 = vadd.f32 %v74, %v90
    %v107 = vadd.f32 %v75, %v91
    %v108 = vadd.f32 %v76, %v92
    %v109 = vadd.f32 %v77, %v93
    %v110 = vadd.f32 %v78, %v94
    %v111 = vadd.f32 %v79, %v95
    %v112 = vadd.f32 %v80, %v96
    %v113 = vadd.f32 %v81, %v97
    %v114 = vadd.f32 %v82, %v98
    %v115 = vadd.f32 %v83, %v99
    %v116 = vadd.f32 %v84, %v100
    %v117 = vadd.f32 %v85, %v101
    %v118 = vadd.f32 %v86, %v102
    %v119 = vadd.f32 %v87, %v103
    %v120 = vadd.f32 %v88, %v104
    %v121 = vpack.c.bf16 %v106, %v105
    %v122 = vpack.c.bf16 %v108, %v107
    %v123 = vpack.c.bf16 %v110, %v109
    %v124 = vpack.c.bf16 %v112, %v111
    %v125 = vpack.c.bf16 %v114, %v113
    %v126 = vpack.c.bf16 %v116, %v115
    %v127 = vpack.c.bf16 %v118, %v117
    %v128 = vpack.c.bf16 %v120, %v119
    %v129 = vld [vmem:[#allocation2] sm:$0xff]
    %v130 = vld [vmem:[#allocation2 + $0x8] sm:$0xff]
    %v131 = vld [vmem:[#allocation3] sm:$0xf]
    %v132 = vld [vmem:[#allocation3 + $0x4] sm:$0xf]
    %v135 = vunpack.c.l.b16 %v131
    %v136 = vunpack.c.l.b16 %v132
    %v137 = vpack.c.b16 %v136, %v135
    %139 = vmatprep.subr.bf16.mxu0 0
    %140 = vmatpush1.bf16.xpose.msra.mxu0 %v128
    %141 = vmatprep.subr.bf16.mxu0 0
    %142 = vmatpush1.bf16.xpose.msra.mxu0 %v127
    %143 = vmatprep.subr.bf16.mxu0 0
    %144 = vmatpush1.bf16.xpose.msra.mxu0 %v126
    %145 = vmatprep.subr.bf16.mxu0 0
    %146 = vmatpush1.bf16.xpose.msra.mxu0 %v125
    %147 = vmatprep.subr.bf16.mxu0 0
    %148 = vmatpush1.bf16.xpose.msra.mxu0 %v124
    %149 = vmatprep.subr.bf16.mxu0 0
    %150 = vmatpush1.bf16.xpose.msra.mxu0 %v123
    %151 = vmatprep.subr.bf16.mxu0 0
    %152 = vmatpush1.bf16.xpose.msra.mxu0 %v122
    %153 = vmatprep.subr.bf16.mxu0 0
    %154 = vmatpush1.bf16.xpose.msra.mxu0 %v121
    %155 = vmatprep.subr.bf16.mxu0 0
    %156 = vmatpush2.bf16.xpose.msra.mxu0 0
    %157 = vmatprep.subr.bf16.mxu0 0
    %158 = vmatpush2.bf16.xpose.msra.mxu0 0
    %159 = vmatprep.subr.bf16.mxu0 0
    %160 = vmatpush2.bf16.xpose.msra.mxu0 0
    %161 = vmatprep.subr.bf16.mxu0 0
    %162 = vmatpush2.bf16.xpose.msra.mxu0 0
    %163 = vmatprep.subr.bf16.mxu0 0
    %164 = vmatpush2.bf16.xpose.msra.mxu0 0
    %165 = vmatprep.subr.bf16.mxu0 0
    %166 = vmatpush2.bf16.xpose.msra.mxu0 0
    %167 = vmatprep.subr.bf16.mxu0 0
    %168 = vmatpush2.bf16.xpose.msra.mxu0 0
    %169 = vmatprep.subr.bf16.mxu0 0
    %170 = vmatpush2.bf16.xpose.msra.mxu0 0
    %171 = vmatprep.mubr.bf16.mxu0 0
    %172 = vmatmul.mubr.bf16.gmra.mxu0 %v137
    %v173 = vpop.f32.mrf.mxu0
    %v174 = vadd.f32 0.0, %v173
    %v175 = vpop.f32.mrf.mxu0
    %v176 = vpop.f32.mrf.mxu0
    %v177 = vadd.f32 0.0, %v176
    %v178 = vpop.f32.mrf.mxu0
    %179 = vdwg.mxu0
    %v180 = vadd.f32 %v129, %v174
    %v181 = vadd.f32 %v130, %v177
    %182 = vst [vmem:[#allocation2] sm:$0xff] %v180
    %183 = vst [vmem:[#allocation2 + $0x8] sm:$0xff] %v181
    // Predicated region
    $region34: #{tpu_custom_call.1} parent=1 // pred_check
      %p184 = pneg %p60
    $region35: #{tpu_custom_call.1} parent=1 // pred_check_branch
      %186 = sbr.rel (%p184) target = $region37
    $region36: #{tpu_custom_call.1} parent=1 // pred_region
      %v187 = vld [vmem:[#allocation2] sm:$0xff]
      %v188 = vld [vmem:[#allocation2 + $0x8] sm:$0xff]
      %189 = vst [vmem:[#allocation9] sm:$0xff] %v187
      %190 = vst [vmem:[#allocation9 + $0x8] sm:$0xff] %v188
    $region37: #{tpu_custom_call.1} parent=1 // pred_fallthru
      _
    // Predicated region
    $region38: #{tpu_custom_call.1} parent=1 // pred_check
      _
    $region39: #{tpu_custom_call.1} parent=1 // pred_check_branch
      %192 = sbr.rel (0) target = $region41
    $region40: #{tpu_custom_call.1} parent=1 // pred_region
      %s194 = ssub.s32 256, 256
      %195 = vsyncadd [#allocation5], %s194
      %s196 = sshll.u32 [#allocation9], 4
      %s197 = int_to_ptr.vmem [resolvable:$true] %s196
      %202 = dma.vmem_to_hbm [thread:$0]  %s197, 256, %s4, [#allocation5], 128, 128, 8
    $region41: #{tpu_custom_call.1} parent=1 // pred_fallthru
      _
    // Predicated region
    $region42: #{tpu_custom_call.1} parent=1 // pred_check
      _
    $region43: #{tpu_custom_call.1} parent=1 // pred_check_branch
      %204 = sbr.rel (0) target = $region45
    $region44: #{tpu_custom_call.1} parent=1 // pred_region
      %205 = dma.done [#allocation5], 256
    $region45: #{tpu_custom_call.1} parent=1 // pred_fallthru
      _
    %206 = vsyncpa [#allocation4], 1
    %207 = vsyncpa [#allocation7], 1
    %208 = vsyncpa [#allocation5], 1

</llo_original>
